<compile_context>
chip_gen: v6e
topology: v6e:2x2x1
jax: 0.10.0
libtpu: 0.0.40
codegen_flags: <defaults>
</compile_context>

<pallas_src>
import math
from functools import partial

import jax
import jax.numpy as jnp
from jax.experimental import pallas as pl
from jax.experimental.pallas import tpu as pltpu

LOSS_WEIGHT = 2.5  # constructor arg `loss_weight`, fixed deterministically

_COL_WIDTHS = (2048, 1024, 512, 256, 128)


def _loss_kernel(pred_ref, tgt_ref, out_ref, *, ignore_nan_targets, loss_weight):
    """Elementwise hot path: upcast + NaN masking + weighted L2 on the VPU."""
    pred = pred_ref[...].astype(jnp.float32)
    tgt = tgt_ref[...].astype(jnp.float32)
    if ignore_nan_targets:
        # torch.where(torch.isnan(target), prediction, target)
        tgt = jnp.where(jnp.isnan(tgt), pred, tgt)
    diff = pred - tgt
    # loss_weight * _compute_loss(pred, target); cast back to output dtype.
    out_ref[...] = ((loss_weight * 0.5) * (diff * diff)).astype(out_ref.dtype)


def _hw_info():
    """(num_tensorcores, vmem_capacity_bytes) with safe fallbacks."""
    num_tc = 1
    vmem_cap = 128 * 1024 * 1024
    try:
        kind = jax.devices()[0].device_kind.lower()
        if "v7" in kind or "tpu7" in kind:
            num_tc = 2
            vmem_cap = 64 * 1024 * 1024
    except Exception:
        pass
    try:
        cap = getattr(pltpu.get_tpu_info(), "vmem_capacity_bytes", None)
        if cap:
            vmem_cap = int(cap)
    except Exception:
        pass
    return num_tc, vmem_cap


def _choose_cols(n):
    """Widest lane-dense column count that divides n (prefer rows % 8 == 0)."""
    for cols in _COL_WIDTHS:
        if n % cols == 0 and (n // cols) % 8 == 0:
            return cols
    for cols in _COL_WIDTHS:
        if n % cols == 0:
            return cols
    return 512  # prefix + tiny jnp tail, handled by the caller


def _round_up(x, m):
    return ((x + m - 1) // m) * m


def _choose_tm(rows, tm_cap, row_align, num_tc):
    """Pick the row-tile so the tile fits VMEM and the step count suits the TC count."""
    tm_cap = max(row_align, (tm_cap // row_align) * row_align)
    if rows <= tm_cap:
        if num_tc >= 2 and rows >= 2 * row_align:
            # 2-TC parts: at least 2 (balanced) grid steps so both cores work.
            return _round_up(pl.cdiv(rows, 2), row_align)
        return rows  # 1-TC parts: single step, no pipeline overhead
    tm = tm_cap
    if num_tc >= 2:
        steps = pl.cdiv(rows, tm)
        if steps % 2 == 1:
            tm = min(tm_cap, _round_up(pl.cdiv(rows, steps + 1), row_align))
    return tm


def loss_forward(prediction, target, *, ignore_nan_targets=False,
                 loss_weight=LOSS_WEIGHT):
    """Pallas equivalent of Loss.forward(pred, target, ignore_nan_targets)."""
    assert prediction.shape == target.shape
    orig_shape = prediction.shape
    out_dtype = jnp.promote_types(prediction.dtype, target.dtype)
    n = math.prod(orig_shape) if orig_shape else 1

    def _jnp_loss(p, t):
        pf = p.astype(jnp.float32)
        tf = t.astype(jnp.float32)
        if ignore_nan_targets:
            tf = jnp.where(jnp.isnan(tf), pf, tf)
        d = pf - tf
        return ((float(loss_weight) * 0.5) * (d * d)).astype(out_dtype)

    cols = _choose_cols(n)
    main = (n // cols) * cols
    tail = n - main
    if main == 0:
        # Tiny problem (< 128 elements): plain jnp is already optimal.
        return _jnp_loss(prediction, target)

    rows = main // cols
    if tail:
        p_flat = prediction.reshape(-1)
        t_flat = target.reshape(-1)
        p2 = p_flat[:main].reshape(rows, cols)
        t2 = t_flat[:main].reshape(rows, cols)
    else:
        p2 = prediction.reshape(rows, cols)
        t2 = target.reshape(rows, cols)

    num_tc, vmem_cap = _hw_info()
    vmem_limit = int(min(vmem_cap // 2, 64 * 1024 * 1024))
    budget = (vmem_limit * 3) // 4  # leave pipeline headroom

    in_bytes = p2.dtype.itemsize + t2.dtype.itemsize
    out_bytes = jnp.dtype(out_dtype).itemsize
    # Sublane alignment for the most tightly packed dtype touched.
    row_align = max(8, 32 // min(p2.dtype.itemsize, t2.dtype.itemsize, out_bytes))
    ws_per_row = 2 * (in_bytes + out_bytes) * cols  # double-buffered in + out
    tm_cap = max(row_align, budget // ws_per_row)
    tm = _choose_tm(rows, tm_cap, row_align, num_tc)
    grid = (pl.cdiv(rows, tm),)

    kernel = partial(_loss_kernel,
                     ignore_nan_targets=bool(ignore_nan_targets),
                     loss_weight=float(loss_weight))

    cost = pl.CostEstimate(
        flops=(5 if ignore_nan_targets else 3) * main,
        transcendentals=0,
        bytes_accessed=main * (in_bytes + out_bytes),
    )

    out2 = pl.pallas_call(
        kernel,
        out_shape=jax.ShapeDtypeStruct((rows, cols), out_dtype),
        grid=grid,
        in_specs=[
            pl.BlockSpec((tm, cols), lambda i: (i, 0)),
            pl.BlockSpec((tm, cols), lambda i: (i, 0)),
        ],
        out_specs=pl.BlockSpec((tm, cols), lambda i: (i, 0)),
        compiler_params=pltpu.CompilerParams(
            dimension_semantics=("parallel",),
            vmem_limit_bytes=vmem_limit),
        cost_estimate=cost,
    )(p2, t2)

    if tail:
        tail_out = _jnp_loss(p_flat[main:], t_flat[main:])
        out = jnp.concatenate([out2.reshape(-1), tail_out])
        return out.reshape(orig_shape)
    return out2.reshape(orig_shape)


def _reference(prediction, target, *, ignore_nan_targets, loss_weight):
    pred = prediction.astype(jnp.float32)
    tgt = target.astype(jnp.float32)
    if ignore_nan_targets:
        tgt = jnp.where(jnp.isnan(tgt), pred, tgt)
    return loss_weight * (0.5 * (pred - tgt) ** 2)


if __name__ == "__main__":
    key = jax.random.PRNGKey(0)
    k_pred, k_tgt = jax.random.split(key)

    B, A, C = 2, 8, 128  # [batch, anchors, code]
    pred = jax.random.normal(k_pred, (B, A, C), dtype=jnp.float32)
    target = jax.random.normal(k_tgt, (B, A, C), dtype=jnp.float32)
    # Inject some NaN targets to exercise the ignore_nan_targets path.
    nan_mask = jax.random.bernoulli(k_tgt, p=0.1, shape=(B, A, C))
    target = jnp.where(nan_mask, jnp.nan, target)

    # Path 1: ignore_nan_targets=True (NaN targets replaced by predictions).
    out_ignore = loss_forward(pred, target, ignore_nan_targets=True)
    jax.block_until_ready(out_ignore)
    ref_ignore = _reference(pred, target, ignore_nan_targets=True,
                            loss_weight=LOSS_WEIGHT)
    assert out_ignore.dtype == jnp.float32
    assert jnp.allclose(out_ignore, ref_ignore, atol=1e-5, rtol=1e-5)
    assert not bool(jnp.any(jnp.isnan(out_ignore)))

    # Path 2: ignore_nan_targets=False (NaNs propagate, like the reference).
    out_plain = loss_forward(pred, target, ignore_nan_targets=False)
    jax.block_until_ready(out_plain)
    ref_plain = _reference(pred, target, ignore_nan_targets=False,
                           loss_weight=LOSS_WEIGHT)
    finite = ~jnp.isnan(ref_plain)
    assert jnp.allclose(jnp.where(finite, out_plain, 0.0),
                        jnp.where(finite, ref_plain, 0.0),
                        atol=1e-5, rtol=1e-5)
    assert bool(jnp.all(jnp.isnan(out_plain) == jnp.isnan(ref_plain)))

    # Path 3: bf16 inputs travel natively and the output stays bf16.
    pred_bf = pred.astype(jnp.bfloat16)
    target_bf = target.astype(jnp.bfloat16)
    out_bf = loss_forward(pred_bf, target_bf, ignore_nan_targets=True)
    jax.block_until_ready(out_bf)
    ref_bf = _reference(pred_bf, target_bf, ignore_nan_targets=True,
                        loss_weight=LOSS_WEIGHT).astype(jnp.bfloat16)
    assert out_bf.dtype == jnp.bfloat16
    assert jnp.allclose(out_bf.astype(jnp.float32), ref_bf.astype(jnp.float32),
                        atol=2e-2, rtol=2e-2)

    # Path 4: shape whose element count is not a multiple of 128 (prefix
    # through the kernel, tiny tail via jnp, no pad / no full-array copies).
    C_odd = 135
    pred_odd = jax.random.normal(k_pred, (B, A, C_odd), dtype=jnp.float32)
    target_odd = jax.random.normal(k_tgt, (B, A, C_odd), dtype=jnp.float32)
    out_odd = loss_forward(pred_odd, target_odd, ignore_nan_targets=False)
    jax.block_until_ready(out_odd)
    ref_odd = _reference(pred_odd, target_odd, ignore_nan_targets=False,
                         loss_weight=LOSS_WEIGHT)
    assert out_odd.shape == (B, A, C_odd)
    assert jnp.allclose(out_odd, ref_odd, atol=1e-5, rtol=1e-5)

    print("KERNEL_OK")
</pallas_src>

<mosaic_0001>
module attributes {stable_mosaic.version = 11 : i64} {
  func.func @_loss_kernel(%arg0: i32, %arg1: memref<8x256xf32, #tpu.memory_space<vmem>>, %arg2: memref<8x256xf32, #tpu.memory_space<vmem>>, %arg3: memref<8x256xf32, #tpu.memory_space<vmem>>) attributes {dimension_semantics = [#tpu.dimension_semantics<parallel>], iteration_bounds = array<i64: 1>, scalar_prefetch = 0 : i64, scratch_operands = 0 : i64, tpu.core_type = #tpu.core_type<tc>, window_params = [{transform_indices = @transform_0, window_bounds = array<i64: 8, 256>}, {transform_indices = @transform_1, window_bounds = array<i64: 8, 256>}, {transform_indices = @transform_2, window_bounds = array<i64: 8, 256>}]} {
    %c0 = arith.constant 0 : index
    %c0_0 = arith.constant 0 : index
    %0 = vector.load %arg1[%c0, %c0_0] : memref<8x256xf32, #tpu.memory_space<vmem>>, vector<8x256xf32>
    %c0_1 = arith.constant 0 : index
    %c0_2 = arith.constant 0 : index
    %1 = vector.load %arg2[%c0_1, %c0_2] : memref<8x256xf32, #tpu.memory_space<vmem>>, vector<8x256xf32>
    %2 = arith.cmpf one, %1, %1 : vector<8x256xf32>
    %3 = arith.select %2, %0, %1 : vector<8x256xi1>, vector<8x256xf32>
    %4 = arith.subf %0, %3 : vector<8x256xf32>
    %5 = arith.mulf %4, %4 : vector<8x256xf32>
    %cst = arith.constant 1.250000e+00 : f32
    %6 = vector.broadcast %cst : f32 to vector<8x256xf32>
    %7 = arith.mulf %6, %5 : vector<8x256xf32>
    %c0_3 = arith.constant 0 : index
    %c0_4 = arith.constant 0 : index
    %8 = vector.load %arg3[%c0_3, %c0_4] : memref<8x256xf32, #tpu.memory_space<vmem>>, vector<8x256xf32>
    tpu.vector_store %arg3[%c0_3, %c0_4], %7 {strides = array<i32>} : memref<8x256xf32, #tpu.memory_space<vmem>>, vector<8x256xf32>,
    return
  }
  func.func @transform_0(%arg0: i32) -> (i32, i32) {
    %c0_i32 = arith.constant 0 : i32
    %c0_i32_0 = arith.constant 0 : i32
    return %arg0, %c0_i32 : i32, i32
  }
  func.func @transform_1(%arg0: i32) -> (i32, i32) {
    %c0_i32 = arith.constant 0 : i32
    %c0_i32_0 = arith.constant 0 : i32
    return %arg0, %c0_i32 : i32, i32
  }
  func.func @transform_2(%arg0: i32) -> (i32, i32) {
    %c0_i32 = arith.constant 0 : i32
    %c0_i32_0 = arith.constant 0 : i32
    return %arg0, %c0_i32 : i32, i32
  }
}

</mosaic_0001>

<llo_original>
// kernel: tpu_custom_call.1
$region0: #{tpu_custom_call.1}
  #allocation0 [shape = 'u32[]', space=smem, size = 0x4, offset = 0x4, fixed_abs, tag = 'smem constant byte address 0x4 - core index']
  #allocation1 [shape = 'u32[144,128]{1,0:T(1,128)}', space=vmem, size = 0x12000, scoped, tag = 'internal scratch']
  %s0 = inlined_call_operand.hbm [shape: f32[8,256], index: 0, kind: input, shape index: {}]
  %s1 = inlined_call_operand.hbm [shape: f32[8,256], index: 1, kind: input, shape index: {}]
  %s2 = inlined_call_operand.hbm [shape: f32[8,256], index: 2, kind: output, shape index: {}]
  %s3 = sld [smem:[#allocation0]]
  $region26: #{tpu_custom_call.1} parent=0
    _
  %s5 = ssub.s32 1, %s3
  %s6 = scalar_select 0, %s5, %s3
  $region1: #{tpu_custom_call.1} parent=0
    #allocation2 [shape = 'u8[8192]{0}', space=vmem, size = 0x2000, scoped, tag = 'input window, operand 0, single buffered']
    #allocation3 [shape = 's32[1]{0}', space=sflag, size = 0x4, scoped, tag = 'scoped memory for tpu_custom_call.1']
    #allocation4 [shape = 's32[1]{0}', space=sflag, size = 0x4, scoped, tag = 'scoped memory for tpu_custom_call.1']
    #allocation5 [shape = 'u8[8192]{0}', space=vmem, size = 0x2000, scoped, tag = 'input window, operand 1, single buffered']
    #allocation6 [shape = 's32[1]{0}', space=sflag, size = 0x4, scoped, tag = 'scoped memory for tpu_custom_call.1']
    #allocation7 [shape = 'u8[8192]{0}', space=vmem, size = 0x2000, scoped, tag = 'output window, operand 0, single buffered']
    %7 = vsyncpa [#allocation3], 0
    %8 = vsyncpa [#allocation6], 0
    %9 = vsyncpa [#allocation4], 0
    // Predicated region
    $region2: #{tpu_custom_call.1} parent=1 // pred_check
      _
    $region3: #{tpu_custom_call.1} parent=1 // pred_check_branch
      %11 = sbr.rel (0) target = $region5
    $region4: #{tpu_custom_call.1} parent=1 // pred_region
      %s13 = ssub.s32 256, 256
      %14 = vsyncadd [#allocation3], %s13
      %s16 = sshll.u32 [#allocation2], 4
      %s17 = int_to_ptr.vmem [resolvable:$true] %s16
      %19 = dma.hbm_to_vmem [thread:$0]  %s0, 256, %s17, [#allocation3]
    $region5: #{tpu_custom_call.1} parent=1 // pred_fallthru
      _
    // Predicated region
    $region6: #{tpu_custom_call.1} parent=1 // pred_check
      _
    $region7: #{tpu_custom_call.1} parent=1 // pred_check_branch
      %21 = sbr.rel (0) target = $region9
    $region8: #{tpu_custom_call.1} parent=1 // pred_region
      %s23 = ssub.s32 256, 256
      %24 = vsyncadd [#allocation6], %s23
      %s26 = sshll.u32 [#allocation5], 4
      %s27 = int_to_ptr.vmem [resolvable:$true] %s26
      %29 = dma.hbm_to_vmem [thread:$0]  %s1, 256, %s27, [#allocation6]
    $region9: #{tpu_custom_call.1} parent=1 // pred_fallthru
      _
    // Predicated region
    $region10: #{tpu_custom_call.1} parent=1 // pred_check
      _
    $region11: #{tpu_custom_call.1} parent=1 // pred_check_branch
      %31 = sbr.rel (0) target = $region13
    $region12: #{tpu_custom_call.1} parent=1 // pred_region
      %32 = dma.done [#allocation3], 256
    $region13: #{tpu_custom_call.1} parent=1 // pred_fallthru
      _
    // Predicated region
    $region14: #{tpu_custom_call.1} parent=1 // pred_check
      _
    $region15: #{tpu_custom_call.1} parent=1 // pred_check_branch
      %34 = sbr.rel (0) target = $region17
    $region16: #{tpu_custom_call.1} parent=1 // pred_region
      %35 = dma.done [#allocation6], 256
    $region17: #{tpu_custom_call.1} parent=1 // pred_fallthru
      _
    %v36 = vld [vmem:[#allocation2] sm:$0xff]
    %v37 = vld [vmem:[#allocation2 + $0x8] sm:$0xff]
    %v38 = vld [vmem:[#allocation5] sm:$0xff]
    %v39 = vld [vmem:[#allocation5 + $0x8] sm:$0xff]
    %vm40 = vcmp.ne.f32.partialorder %v38, %v38
    %vm41 = vcmp.ne.f32.partialorder %v39, %v39
    %v42 = vsel %vm40, %v36, %v38
    %v43 = vsel %vm41, %v37, %v39
    %v44 = vsub.f32 %v36, %v42
    %v45 = vsub.f32 %v37, %v43
    %v46 = vmul.f32 %v44, %v44
    %v47 = vmul.f32 %v45, %v45
    %v48 = vmul.f32 %v46, 1.25
    %v49 = vmul.f32 %v47, 1.25
    %50 = vst [vmem:[#allocation7] sm:$0xff] %v48
    %51 = vst [vmem:[#allocation7 + $0x8] sm:$0xff] %v49
    // Predicated region
    $region18: #{tpu_custom_call.1} parent=1 // pred_check
      _
    $region19: #{tpu_custom_call.1} parent=1 // pred_check_branch
      %53 = sbr.rel (0) target = $region21
    $region20: #{tpu_custom_call.1} parent=1 // pred_region
      %s55 = ssub.s32 256, 256
      %56 = vsyncadd [#allocation4], %s55
      %s58 = sshll.u32 [#allocation7], 4
      %s59 = int_to_ptr.vmem [resolvable:$true] %s58
      %61 = dma.vmem_to_hbm [thread:$0]  %s59, 256, %s2, [#allocation4]
    $region21: #{tpu_custom_call.1} parent=1 // pred_fallthru
      _
    // Predicated region
    $region22: #{tpu_custom_call.1} parent=1 // pred_check
      _
    $region23: #{tpu_custom_call.1} parent=1 // pred_check_branch
      %63 = sbr.rel (0) target = $region25
    $region24: #{tpu_custom_call.1} parent=1 // pred_region
      %64 = dma.done [#allocation4], 256
    $region25: #{tpu_custom_call.1} parent=1 // pred_fallthru
      _
    %65 = vsyncpa [#allocation3], 1
    %66 = vsyncpa [#allocation6], 1
    %67 = vsyncpa [#allocation4], 1

</llo_original>
